<compile_context>
chip_gen: v6e
topology: v6e:2x2x1
jax: 0.10.0
libtpu: 0.0.40
codegen_flags: <defaults>
</compile_context>

<pallas_src>
import functools

import jax
import jax.numpy as jnp
import numpy as np
from jax.experimental import pallas as pl
from jax.experimental.pallas import tpu as pltpu


# ------------------------------ fused kernel --------------------------------

def _inception_kernel(x_ref, wb_ref, o_ref, *, cin, out, W):
    """One row-block: x_ref (TR, Cin*W) -> o_ref (TR, 4*out*W).

    wb_ref holds the packed banded weight matrices + biases:
        rows [0:rb), cols [0:C1 | C1:C1+C2 | C1+C2:]  -> A1 | A2 | A3
        row  rb                                        -> packed biases
    """
    f32 = jnp.float32
    OW, CW = out * W, cin * W
    C1 = (2 * out + 2 * cin) * W          # level-1 output lane width
    C2 = 2 * OW                           # level-2 output lane width
    C3 = OW                               # level-3 output lane width
    rb = max(2 * cin, out) * W            # row holding the packed biases

    x = x_ref[...].astype(f32)                                        # (TR, CW)

    # level 1: x -> [branch_pool | branch1_1 | y21 | y31]     (one MXU dot)
    y1 = (jnp.dot(x, wb_ref[0:CW, 0:C1], preferred_element_type=f32)
          + wb_ref[rb:rb + 1, 0:C1])
    # level 2: [y21 | y31] -> [branch2_2 | y32]               (one MXU dot)
    y_mid = y1[:, 2 * OW:]
    y2 = (jnp.dot(y_mid, wb_ref[0:2 * CW, C1:C1 + C2],
                  preferred_element_type=f32)
          + wb_ref[rb:rb + 1, C1:C1 + C2])
    # level 3: y32 -> branch3_3                               (one MXU dot)
    y32 = y2[:, OW:]
    b3 = (jnp.dot(y32, wb_ref[0:OW, C1 + C2:C1 + C2 + C3],
                  preferred_element_type=f32)
          + wb_ref[rb:rb + 1, C1 + C2:C1 + C2 + C3])

    # torch.cat([branch_pool, branch1_1, branch2_2, branch3_3], dim=1)
    # -> ONE lane-dense (TR, 4*out*W) store (256 lanes here).
    o_ref[...] = jnp.concatenate([y1[:, :2 * OW], y2[:, :OW], b3],
                                 axis=-1).astype(o_ref.dtype)


# ----------------- weights-only preprocessing (wrapper side) -----------------

def _band_selector(K, W):
    """S[t, u, w] = 1 iff input position u feeds output position w through tap t
    of an odd-K, stride-1, 'same'-padded 1-D conv along W."""
    pad = (K - 1) // 2
    S = np.zeros((K, W, W), np.float32)
    for t in range(K):
        for u in range(W):
            w = u - (t - pad)
            if 0 <= w < W:
                S[t, u, w] = 1.0
    return S


def _conv_band(w, W):
    """(K, Cin, Cout) conv weights -> banded (Cin*W, Cout*W) row-space matrix."""
    K, Ci, Co = w.shape
    S = jnp.asarray(_band_selector(K, W))
    A = jnp.einsum("kco,kuw->cuow", w.astype(jnp.float32), S)
    return A.reshape(Ci * W, Co * W)


def _pool_band(K, Cin, W):
    """F.avg_pool2d(x, (1,K), stride=1, 'same', count_include_pad=True) as an
    exact (Cin*W, Cin*W) row-space matrix (block-diagonal over channels)."""
    pad = (K - 1) // 2
    P1 = np.zeros((W, W), np.float32)
    for w in range(W):
        for j in range(K):
            u = w + j - pad
            if 0 <= u < W:
                P1[u, w] = 1.0 / K
    return jnp.asarray(np.kron(np.eye(Cin, dtype=np.float32), P1))


def _pack_params(params, W, cin, out, k2):
    """Fold the 7 convs + avg-pool into 3 banded matrices (+ biases) and pack
    everything into a single resident f32 buffer (one DMA, constant index_map)."""
    f32 = jnp.float32
    OW, CW = out * W, cin * W

    def band(name):
        w, b = params[name]
        return _conv_band(w, W), jnp.repeat(b.astype(f32), W)

    A11, c11 = band("branch1_1")     # (CW, OW)
    A21, c21 = band("branch2_1")     # (CW, CW)
    A22, c22 = band("branch2_2")     # (CW, OW)
    A31, c31 = band("branch3_1")     # (CW, CW)
    A32, c32 = band("branch3_2")     # (CW, OW)
    A33, c33 = band("branch3_3")     # (OW, OW)
    Apl, cpl = band("branch_pool")   # (CW, OW)

    # exact fold: branch_pool(avg_pool(x)) == x @ (P @ Apl) + bias (both linear)
    Apool = jnp.dot(_pool_band(k2, cin, W), Apl)                    # (CW, OW)

    # level 1: x -> [branch_pool | branch1_1 | y21 | y31]
    A1 = jnp.concatenate([Apool, A11, A21, A31], axis=1)            # (CW, C1)
    c1 = jnp.concatenate([cpl, c11, c21, c31])
    # level 2: [y21 | y31] -> [branch2_2 | y32]
    Z = jnp.zeros((CW, OW), f32)
    A2 = jnp.concatenate(
        [jnp.concatenate([A22, Z], axis=1),
         jnp.concatenate([Z, A32], axis=1)], axis=0)                # (2CW, 2OW)
    c2 = jnp.concatenate([c22, c32])
    # level 3: y32 -> branch3_3
    A3, c3 = A33, c33                                               # (OW, OW)

    C1, C2, C3 = A1.shape[1], A2.shape[1], A3.shape[1]
    rb = max(2 * cin, out) * W
    n_rows = ((rb + 1) + 7) // 8 * 8
    wb = jnp.zeros((n_rows, C1 + C2 + C3), f32)
    wb = wb.at[:A1.shape[0], 0:C1].set(A1)
    wb = wb.at[:A2.shape[0], C1:C1 + C2].set(A2)
    wb = wb.at[:A3.shape[0], C1 + C2:].set(A3)
    wb = wb.at[rb, 0:C1].set(c1)
    wb = wb.at[rb, C1:C1 + C2].set(c2)
    wb = wb.at[rb, C1 + C2:].set(c3)
    return wb


# -------------------------------- wrapper ------------------------------------

def _pick_row_block(R, cap=1024):
    """Choose (TR, Rp): row-block size and (possibly padded) total row count.

    TR is a multiple of 8 when possible; >= 2 equal blocks are preferred so a
    "parallel" grid keeps both v7x TensorCores busy.  Row counts with no
    friendly divisor are padded instead of degrading to TR = 1."""
    cands = [d for d in range(8, min(R, cap) + 1, 8) if R % d == 0]
    if cands:
        multi = [d for d in cands if R // d >= 2]
        return (max(multi) if multi else max(cands)), R
    if R <= 8:
        return R, R
    TR = min(cap, max(8, (((R + 1) // 2) + 7) // 8 * 8))
    Rp = ((R + TR - 1) // TR) * TR
    return TR, Rp


def inception_block_forward(x, params, row_block=None):
    """x: NCHW; returns NCHW with 4*(out_ch//4) channels (PyTorch cat order)."""
    N, C, H, W = x.shape
    k1 = params["branch1_1"][0].shape[0]
    k2 = params["branch3_2"][0].shape[0]
    k3 = params["branch2_2"][0].shape[0]
    assert k1 % 2 == 1 and k2 % 2 == 1 and k3 % 2 == 1, \
        "even kernel sizes change the output width vs. PyTorch 'same' padding"
    out = params["branch1_1"][0].shape[2]
    Ctot = 4 * out
    R = N * H

    # one-time, weights-only preprocessing (banded matrices + pool fold)
    wb = _pack_params(params, W, C, out, k2)

    if row_block is None:
        TR, Rp = _pick_row_block(R)
    else:
        TR = row_block
        Rp = ((R + TR - 1) // TR) * TR

    # NCHW -> row space: row r = (n, h); lane index = c*W + w (lane-dense)
    xr = jnp.transpose(x, (0, 2, 1, 3)).reshape(R, C * W)
    if Rp != R:
        xr = jnp.concatenate(
            [xr, jnp.zeros((Rp - R, C * W), xr.dtype)], axis=0)

    kernel = functools.partial(_inception_kernel, cin=C, out=out, W=W)
    out_rows = pl.pallas_call(
        kernel,
        out_shape=jax.ShapeDtypeStruct((Rp, Ctot * W), x.dtype),
        grid=(Rp // TR,),
        in_specs=[pl.BlockSpec((TR, C * W), lambda r: (r, 0)),
                  pl.BlockSpec(wb.shape, lambda r: (0, 0))],   # resident params
        out_specs=pl.BlockSpec((TR, Ctot * W), lambda r: (r, 0)),
        compiler_params=pltpu.CompilerParams(
            dimension_semantics=("parallel",),
            vmem_limit_bytes=32 * 1024 * 1024),
    )(xr, wb)

    out_rows = out_rows[:R]
    # rows -> NCHW
    return out_rows.reshape(N, H, Ctot, W).transpose(0, 2, 1, 3)


# ------------------------- params (torch-like init) --------------------------

def init_params(key, in_ch, out_ch, k1, k2, k3, dtype=jnp.float32):
    out = int(out_ch // 4)
    specs = {
        "branch1_1":   (k1, in_ch, out),
        "branch2_1":   (k1, in_ch, in_ch),
        "branch2_2":   (k3, in_ch, out),
        "branch3_1":   (k1, in_ch, in_ch),
        "branch3_2":   (k2, in_ch, out),
        "branch3_3":   (k2, out, out),
        "branch_pool": (k1, in_ch, out),
    }
    params = {}
    for name, (K, cin, cout) in specs.items():
        key, kw, kb = jax.random.split(key, 3)
        bound = 1.0 / np.sqrt(cin * K)
        w = jax.random.uniform(kw, (K, cin, cout), dtype, -bound, bound)
        b = jax.random.uniform(kb, (cout,), dtype, -bound, bound)
        params[name] = (w, b)
    return params


# --------------------------- pure-JAX reference ------------------------------

def _conv_ref(x_nchw, w_klc, b, pad):
    w = jnp.transpose(w_klc, (2, 1, 0))[:, :, None, :]   # (Cout, Cin, 1, K)
    y = jax.lax.conv_general_dilated(
        x_nchw, w, window_strides=(1, 1), padding=[(0, 0), (pad, pad)],
        dimension_numbers=("NCHW", "OIHW", "NCHW"))
    return y + b[None, :, None, None]


def _ref_forward(x, params, k2):
    def cv(name, inp):
        w, b = params[name]
        return _conv_ref(inp, w, b, (w.shape[0] - 1) // 2)
    b1 = cv("branch1_1", x)
    b2 = cv("branch2_2", cv("branch2_1", x))
    b3 = cv("branch3_3", cv("branch3_2", cv("branch3_1", x)))
    pad = (k2 - 1) // 2
    pooled = jax.lax.reduce_window(
        x, 0.0, jax.lax.add, (1, 1, 1, k2), (1, 1, 1, 1),
        [(0, 0), (0, 0), (0, 0), (pad, pad)]) / k2
    bp = cv("branch_pool", pooled)
    return jnp.concatenate([bp, b1, b2, b3], axis=1)


# ----------------------------------- main ------------------------------------

if __name__ == "__main__":
    in_ch, out_ch = 4, 16
    kernel_1, kernel_2, kernel_3 = 1, 3, 5        # odd kernels (module assumption)

    key = jax.random.PRNGKey(0)
    kx, kp = jax.random.split(key)
    x = jax.random.normal(kx, (2, in_ch, 16, 16), jnp.float32)   # NCHW
    params = init_params(kp, in_ch, out_ch, kernel_1, kernel_2, kernel_3)

    fwd = jax.jit(inception_block_forward)
    out = jax.block_until_ready(fwd(x, params))

    ref = _ref_forward(x, params, kernel_2)
    np.testing.assert_allclose(np.asarray(out), np.asarray(ref),
                               rtol=1e-5, atol=1e-5)
    print("KERNEL_OK")
</pallas_src>

<mosaic_0001>
module attributes {stable_mosaic.version = 11 : i64} {
  func.func @_inception_kernel(%arg0: i32, %arg1: memref<16x64xf32, #tpu.memory_space<vmem>>, %arg2: memref<136x448xf32, #tpu.memory_space<vmem>>, %arg3: memref<16x256xf32, #tpu.memory_space<vmem>>) attributes {dimension_semantics = [#tpu.dimension_semantics<parallel>], iteration_bounds = array<i64: 2>, scalar_prefetch = 0 : i64, scratch_operands = 0 : i64, tpu.core_type = #tpu.core_type<tc>, window_params = [{transform_indices = @transform_0, window_bounds = array<i64: 16, 64>}, {pipeline_mode = #tpu.pipeline_mode<synchronous>, transform_indices = @transform_1, window_bounds = array<i64: 136, 448>}, {transform_indices = @transform_2, window_bounds = array<i64: 16, 256>}]} {
    %c0 = arith.constant 0 : index
    %c0_0 = arith.constant 0 : index
    %0 = vector.load %arg1[%c0, %c0_0] : memref<16x64xf32, #tpu.memory_space<vmem>>, vector<16x64xf32>
    %c0_1 = arith.constant 0 : index
    %c0_2 = arith.constant 0 : index
    %1 = vector.load %arg2[%c0_1, %c0_2] : memref<136x448xf32, #tpu.memory_space<vmem>>, vector<64x256xf32>
    %cst = arith.constant dense<0.000000e+00> : vector<16x256xf32>
    %2 = tpu.matmul %0, %1, %cst {dimension_numbers = #tpu.dot_dimension_numbers<[1], [0], [0], [1], [0, 0, 1, 1], [], []>} : vector<16x64xf32>, vector<64x256xf32>, vector<16x256xf32> -> vector<16x256xf32>
    %c128 = arith.constant 128 : index
    %c0_3 = arith.constant 0 : index
    %3 = vector.load %arg2[%c128, %c0_3] : memref<136x448xf32, #tpu.memory_space<vmem>>, vector<1x256xf32>
    %4 = vector.broadcast %3 : vector<1x256xf32> to vector<16x256xf32>
    %5 = arith.addf %2, %4 : vector<16x256xf32>
    %6 = vector.extract_strided_slice %5 {offsets = [0, 128], sizes = [16, 128], strides = [1, 1]} : vector<16x256xf32> to vector<16x128xf32>
    %c0_4 = arith.constant 0 : index
    %c256 = arith.constant 256 : index
    %7 = vector.load %arg2[%c0_4, %c256] : memref<136x448xf32, #tpu.memory_space<vmem>>, vector<128x128xf32>
    %cst_5 = arith.constant dense<0.000000e+00> : vector<16x128xf32>
    %8 = tpu.matmul %6, %7, %cst_5 {dimension_numbers = #tpu.dot_dimension_numbers<[1], [0], [0], [1], [0, 0, 1, 1], [], []>} : vector<16x128xf32>, vector<128x128xf32>, vector<16x128xf32> -> vector<16x128xf32>
    %c128_6 = arith.constant 128 : index
    %c256_7 = arith.constant 256 : index
    %9 = vector.load %arg2[%c128_6, %c256_7] : memref<136x448xf32, #tpu.memory_space<vmem>>, vector<1x128xf32>
    %10 = vector.broadcast %9 : vector<1x128xf32> to vector<16x128xf32>
    %11 = arith.addf %8, %10 : vector<16x128xf32>
    %12 = vector.extract_strided_slice %11 {offsets = [0, 64], sizes = [16, 64], strides = [1, 1]} : vector<16x128xf32> to vector<16x64xf32>
    %c0_8 = arith.constant 0 : index
    %c384 = arith.constant 384 : index
    %13 = vector.load %arg2[%c0_8, %c384] : memref<136x448xf32, #tpu.memory_space<vmem>>, vector<64x64xf32>
    %cst_9 = arith.constant dense<0.000000e+00> : vector<16x64xf32>
    %14 = tpu.matmul %12, %13, %cst_9 {dimension_numbers = #tpu.dot_dimension_numbers<[1], [0], [0], [1], [0, 0, 1, 1], [], []>} : vector<16x64xf32>, vector<64x64xf32>, vector<16x64xf32> -> vector<16x64xf32>
    %c128_10 = arith.constant 128 : index
    %c384_11 = arith.constant 384 : index
    %15 = vector.load %arg2[%c128_10, %c384_11] : memref<136x448xf32, #tpu.memory_space<vmem>>, vector<1x64xf32>
    %16 = vector.broadcast %15 : vector<1x64xf32> to vector<16x64xf32>
    %17 = arith.addf %14, %16 : vector<16x64xf32>
    %18 = vector.extract_strided_slice %5 {offsets = [0, 0], sizes = [16, 128], strides = [1, 1]} : vector<16x256xf32> to vector<16x128xf32>
    %19 = vector.extract_strided_slice %11 {offsets = [0, 0], sizes = [16, 64], strides = [1, 1]} : vector<16x128xf32> to vector<16x64xf32>
    %20 = tpu.concatenate %18, %19, %17 in 1 : vector<16x128xf32>, vector<16x64xf32>, vector<16x64xf32> -> vector<16x256xf32>
    %c0_12 = arith.constant 0 : index
    %c0_13 = arith.constant 0 : index
    %21 = vector.load %arg3[%c0_12, %c0_13] : memref<16x256xf32, #tpu.memory_space<vmem>>, vector<16x256xf32>
    tpu.vector_store %arg3[%c0_12, %c0_13], %20 {strides = array<i32>} : memref<16x256xf32, #tpu.memory_space<vmem>>, vector<16x256xf32>,
    return
  }
  func.func @transform_0(%arg0: i32) -> (i32, i32) {
    %c0_i32 = arith.constant 0 : i32
    %c0_i32_0 = arith.constant 0 : i32
    return %arg0, %c0_i32 : i32, i32
  }
  func.func @transform_1(%arg0: i32) -> (i32, i32) {
    %c0_i32 = arith.constant 0 : i32
    %c0_i32_0 = arith.constant 0 : i32
    %c0_i32_1 = arith.constant 0 : i32
    return %c0_i32, %c0_i32_0 : i32, i32
  }
  func.func @transform_2(%arg0: i32) -> (i32, i32) {
    %c0_i32 = arith.constant 0 : i32
    %c0_i32_0 = arith.constant 0 : i32
    return %arg0, %c0_i32 : i32, i32
  }
}

</mosaic_0001>

<llo_original>
// kernel: inception_block_forward.1
$region0: #{inception_block_forward.1}
  #allocation0 [shape = 'u32[]', space=smem, size = 0x4, offset = 0x4, fixed_abs, tag = 'smem constant byte address 0x4 - core index']
  #allocation1 [shape = 'u32[144,128]{1,0:T(1,128)}', space=vmem, size = 0x12000, scoped, tag = 'internal scratch']
  %s0 = inlined_call_operand.vmem [shape: f32[32,64], index: 0, kind: input, shape index: {}]
  %s1 = inlined_call_operand.vmem [shape: f32[136,448], index: 1, kind: input, shape index: {}]
  %s2 = inlined_call_operand.vmem [shape: f32[32,256], index: 2, kind: output, shape index: {}]
  %s3 = sld [smem:[#allocation0]]
  $region41: #{inception_block_forward.1} parent=0
    _
  %s5 = ssub.s32 1, %s3
  %s6 = scalar_select 0, %s5, %s3
  loop: start=0, step=1, limit=4
  $region2: #{inception_block_forward.1} parent=0 // loop_pre_header
    _
  $region3: #{inception_block_forward.1} parent=0 // loop_header
    %s8 = sphi 0, %s12
    %p9 = scmp.ge.s32.totalorder %s8, 4
    %s18 = sphi 0, %s20
    %s21 = sphi 0, %s18
    %s22 = sphi 0, %s21
    %s38 = sphi 0, %s22
    %s42 = sphi 0, %s42
    %s44 = sphi 0, %s42
    %s45 = sphi 0, %s44
    %s59 = sphi 0, %s45
    %s65 = sphi 0, %s67
    %s68 = sphi 0, %s65
    %s69 = sphi 0, %s68
    %s85 = sphi 0, %s69
  $region4: #{inception_block_forward.1} parent=0 // loop_header_branch
    %11 = sbr.rel (%p9) target = $region8
  $region5: #{inception_block_forward.1} parent=0 // loop_body
    %s13 = ssub.s32 %s8, 1
    %s14 = ssub.s32 %s8, 2
    %s15 = sadd.s32 %s8, 1
    %s16 = ssub.s32 %s8, %s15
    %p17 = scmp.eq.s32.totalorder %s16, 0
    %s19 = sadd.s32 %s18, 1
    %s20 = scalar_select %p17, %s18, %s19
    %p23 = pneg %p17
    %p24 = scmp.eq.s32.totalorder %s8, 1
    %p25 = por %p23, %p24
    %p26 = scmp.ne.s32.totalorder %s18, %s21
    %p27 = scmp.eq.s32.totalorder %s8, 0
    %p28 = por %p26, %p27
    %p29 = scmp.ne.s32.totalorder %s18, %s21
    %p30 = scmp.eq.s32.totalorder %s13, 1
    %p31 = por %p29, %p30
    %p32 = scmp.ne.s32.totalorder %s21, %s22
    %p33 = scmp.eq.s32.totalorder %s13, 0
    %p34 = por %p32, %p33
    %p35 = scmp.ne.s32.totalorder %s21, %s22
    %p36 = scmp.eq.s32.totalorder %s14, 1
    %p37 = por %p35, %p36
    %p39 = scmp.ne.s32.totalorder %s22, %s38
    %p40 = scmp.eq.s32.totalorder %s14, 0
    %p41 = por %p39, %p40
    %s43 = sadd.s32 %s42, 1
    %p46 = scmp.eq.s32.totalorder %s8, 1
    %p47 = scmp.ne.s32.totalorder %s42, %s44
    %p48 = scmp.eq.s32.totalorder %s8, 0
    %p49 = por %p47, %p48
    %p50 = scmp.ne.s32.totalorder %s42, %s44
    %p51 = scmp.eq.s32.totalorder %s13, 1
    %p52 = por %p50, %p51
    %p53 = scmp.ne.s32.totalorder %s44, %s45
    %p54 = scmp.eq.s32.totalorder %s13, 0
    %p55 = por %p53, %p54
    %p56 = scmp.ne.s32.totalorder %s44, %s45
    %p57 = scmp.eq.s32.totalorder %s14, 1
    %p58 = por %p56, %p57
    %p60 = scmp.ne.s32.totalorder %s45, %s59
    %p61 = scmp.eq.s32.totalorder %s14, 0
    %p62 = por %p60, %p61
    %s63 = ssub.s32 %s8, %s15
    %p64 = scmp.eq.s32.totalorder %s63, 0
    %s66 = sadd.s32 %s65, 1
    %s67 = scalar_select %p64, %s65, %s66
    %p70 = pneg %p64
    %p71 = scmp.eq.s32.totalorder %s8, 1
    %p72 = por %p70, %p71
    %p73 = scmp.ne.s32.totalorder %s65, %s68
    %p74 = scmp.eq.s32.totalorder %s8, 0
    %p75 = por %p73, %p74
    %p76 = scmp.ne.s32.totalorder %s65, %s68
    %p77 = scmp.eq.s32.totalorder %s13, 1
    %p78 = por %p76, %p77
    %p79 = scmp.ne.s32.totalorder %s68, %s69
    %p80 = scmp.eq.s32.totalorder %s13, 0
    %p81 = por %p79, %p80
    %p82 = scmp.ne.s32.totalorder %s68, %s69
    %p83 = scmp.eq.s32.totalorder %s14, 1
    %p84 = por %p82, %p83
    %p86 = scmp.ne.s32.totalorder %s69, %s85
    %p87 = scmp.eq.s32.totalorder %s14, 0
    %p88 = por %p86, %p87
    %p89 = scmp.le.s32.totalorder 1, %s8
    %p90 = scmp.lt.s32.totalorder %s8, 3
    %p91 = pnand %p89, %p90
    %p92 = pneg %p91
    // Predicated region
    $region9: #{inception_block_forward.1} parent=5 // pred_check
      _
    $region10: #{inception_block_forward.1} parent=5 // pred_check_branch
      %94 = sbr.rel (%p91) target = $region12
    $region11: #{inception_block_forward.1} parent=5 // pred_region
      %s95 = ssub.s32 %s8, 1
      // Predicated region
      $region13: #{inception_block_forward.1} parent=11 // pred_check
        %p96 = pneg %p55
      $region14: #{inception_block_forward.1} parent=11 // pred_check_branch
        %98 = sbr.rel (%p96) target = $region16
      $region15: #{inception_block_forward.1} parent=11 // pred_region
        _
      $region16: #{inception_block_forward.1} parent=11 // pred_fallthru
        _
    $region12: #{inception_block_forward.1} parent=5 // pred_fallthru
      _
    %p99 = scmp.lt.s32.totalorder %s8, 2
    // Predicated region
    $region17: #{inception_block_forward.1} parent=5 // pred_check
      %p100 = pneg %p99
    $region18: #{inception_block_forward.1} parent=5 // pred_check_branch
      %102 = sbr.rel (%p100) target = $region20
    $region19: #{inception_block_forward.1} parent=5 // pred_region
      // Predicated region
      $region21: #{inception_block_forward.1} parent=19 // pred_check
        %p103 = pneg %p28
      $region22: #{inception_block_forward.1} parent=19 // pred_check_branch
        %105 = sbr.rel (%p103) target = $region24
      $region23: #{inception_block_forward.1} parent=19 // pred_region
        %s106 = smul.u32 2, %s8
        %p107 = scmp.lt.s32.totalorder %s106, 3
        %s108 = scalar_select %p107, %s106, 3
        %s109 = smul.addr %s108, 8
        %s110 = scalar_lea.vmem %s0, %s109
        %s111 = smul.u32 2, %s8
      $region24: #{inception_block_forward.1} parent=19 // pred_fallthru
        _
    $region20: #{inception_block_forward.1} parent=5 // pred_fallthru
      _
    %p112 = scmp.le.s32.totalorder 1, %s8
    %p113 = scmp.lt.s32.totalorder %s8, 3
    %p114 = pnand %p112, %p113
    %p115 = pneg %p114
    // Predicated region
    $region25: #{inception_block_forward.1} parent=5 // pred_check
      _
    $region26: #{inception_block_forward.1} parent=5 // pred_check_branch
      %117 = sbr.rel (%p114) target = $region28
    $region27: #{inception_block_forward.1} parent=5 // pred_region
      %s118 = ssub.s32 %s8, 1
      %s119 = smul.u32 2, %s13
      %p120 = scmp.lt.s32.totalorder %s119, 3
      %s121 = scalar_select %p120, %s119, 3
      %s122 = smul.addr %s121, 8
      %s123 = scalar_lea.vmem %s0, %s122
      %p124 = pneg %p34
      %p125 = pneg %p31
      %p126 = pneg %p55
      %p127 = pneg %p52
      %p128 = pneg %p81
      %p129 = pneg %p78
      %s130 = smul.u32 2, %s13
      %p131 = scmp.lt.s32.totalorder %s130, 3
      %s132 = scalar_select %p131, %s130, 3
      %s133 = smul.addr %s132, 2
      %s134 = smul.addr %s133, 8
      %s135 = scalar_lea.vmem %s2, %s134
      %s136 = smul.u32 2, %s13
      %p137 = scmp.lt.s32.totalorder %s136, 3
      %s138 = scalar_select %p137, %s136, 3
      %s139 = smul.addr %s138, 8
      %s140 = scalar_lea.vmem %s0, %s139
      %s141 = smul.u32 2, %s13
      %s142 = smul.u32 2, %s13
      %p143 = scmp.lt.s32.totalorder %s142, 3
      %s144 = scalar_select %p143, %s142, 3
      %s145 = smul.addr %s144, 2
      %s146 = smul.addr %s145, 8
      %s147 = scalar_lea.vmem %s2, %s146
      %s148 = smul.u32 2, %s13
      %v149 = vld [vmem:[%s140] sm:$0xff]
      %v150 = vld [vmem:[%s140 + $0x8] sm:$0xff]
      %v151 = vld [vmem:[%s1] sm:$0xff]
      %v152 = vld [vmem:[%s1 + $0x8] sm:$0xff]
      %v153 = vld [vmem:[%s1 + $0x20] sm:$0xff]
      %v154 = vld [vmem:[%s1 + $0x28] sm:$0xff]
      %v155 = vld [vmem:[%s1 + $0x40] sm:$0xff]
      %v156 = vld [vmem:[%s1 + $0x48] sm:$0xff]
      %v157 = vld [vmem:[%s1 + $0x60] sm:$0xff]
      %v158 = vld [vmem:[%s1 + $0x68] sm:$0xff]
      %v159 = vld [vmem:[%s1 + $0x80] sm:$0xff]
      %v160 = vld [vmem:[%s1 + $0x88] sm:$0xff]
      %v161 = vld [vmem:[%s1 + $0xa0] sm:$0xff]
      %v162 = vld [vmem:[%s1 + $0xa8] sm:$0xff]
      %v163 = vld [vmem:[%s1 + $0xc0] sm:$0xff]
      %v164 = vld [vmem:[%s1 + $0xc8] sm:$0xff]
      %v165 = vld [vmem:[%s1 + $0xe0] sm:$0xff]
      %v166 = vld [vmem:[%s1 + $0xe8] sm:$0xff]
      %s167 = scalar_lea.vmem %s1, 512
      %v168 = vld [vmem:[%s167] ss:$8 sm:$0x3]
      %v170 = vlaneseq
      %v171 = vshrl.u32 %v170, 7
      %v172 = vsub.s32 0, %v171
      %v173 = vrot.slane %v168, %v172
      %v174 = vlaneseq
      %v175 = vshrl.u32 %v174, 7
      %v176 = vsub.s32 1, %v175
      %v177 = vrot.slane %v168, %v176
      %vm180 = vcmask 523264
      %v182 = vsel %vm180, %v149, 0
      %v185 = vsel %vm180, %v150, 0
      %187 = vmatprep.subr.mxu0 0.0
      %188 = vmatpush1.msra.mxu0 0.0
      %189 = vmatprep.subr.mxu0 0.0
      %190 = vmatpush1.msra.mxu0 0.0
      %191 = vmatprep.subr.mxu0 0.0
      %192 = vmatpush1.msra.mxu0 0.0
      %193 = vmatprep.subr.mxu0 0.0
      %194 = vmatpush1.msra.mxu0 0.0
      %195 = vmatprep.subr.mxu0 0.0
      %196 = vmatpush1.msra.mxu0 0.0
      %197 = vmatprep.subr.mxu0 0.0
      %198 = vmatpush1.msra.mxu0 0.0
      %199 = vmatprep.subr.mxu0 0.0
      %200 = vmatpush1.msra.mxu0 0.0
      %201 = vmatprep.subr.mxu0 0.0
      %202 = vmatpush1.msra.mxu0 0.0
      %203 = vmatprep.subr.mxu0 %v166
      %204 = vmatpush1.msra.mxu0 %v165
      %205 = vmatprep.subr.mxu0 %v164
      %206 = vmatpush1.msra.mxu0 %v163
      %207 = vmatprep.subr.mxu0 %v162
      %208 = vmatpush1.msra.mxu0 %v161
      %209 = vmatprep.subr.mxu0 %v160
      %210 = vmatpush1.msra.mxu0 %v159
      %211 = vmatprep.subr.mxu0 %v158
      %212 = vmatpush1.msra.mxu0 %v157
      %213 = vmatprep.subr.mxu0 %v156
      %214 = vmatpush1.msra.mxu0 %v155
      %215 = vmatprep.subr.mxu0 %v154
      %216 = vmatpush1.msra.mxu0 %v153
      %217 = vmatprep.subr.mxu0 %v152
      %218 = vmatpush1.msra.mxu0 %v151
      %219 = vmatprep.subr.mxu0 0.0
      %220 = vmatpush2.msra.mxu0 0.0
      %221 = vmatprep.subr.mxu0 0.0
      %222 = vmatpush2.msra.mxu0 0.0
      %223 = vmatprep.subr.mxu0 0.0
      %224 = vmatpush2.msra.mxu0 0.0
      %225 = vmatprep.subr.mxu0 0.0
      %226 = vmatpush2.msra.mxu0 0.0
      %227 = vmatprep.subr.mxu0 0.0
      %228 = vmatpush2.msra.mxu0 0.0
      %229 = vmatprep.subr.mxu0 0.0
      %230 = vmatpush2.msra.mxu0 0.0
      %231 = vmatprep.subr.mxu0 0.0
      %232 = vmatpush2.msra.mxu0 0.0
      %233 = vmatprep.subr.mxu0 0.0
      %234 = vmatpush2.msra.mxu0 0.0
      %235 = vmatprep.subr.mxu0 0.0
      %236 = vmatpush2.msra.mxu0 0.0
      %237 = vmatprep.subr.mxu0 0.0
      %238 = vmatpush2.msra.mxu0 0.0
      %239 = vmatprep.subr.mxu0 0.0
      %240 = vmatpush2.msra.mxu0 0.0
      %241 = vmatprep.subr.mxu0 0.0
      %242 = vmatpush2.msra.mxu0 0.0
      %243 = vmatprep.subr.mxu0 0.0
      %244 = vmatpush2.msra.mxu0 0.0
      %245 = vmatprep.subr.mxu0 0.0
      %246 = vmatpush2.msra.mxu0 0.0
      %247 = vmatprep.subr.mxu0 0.0
      %248 = vmatpush2.msra.mxu0 0.0
      %249 = vmatprep.subr.mxu0 0.0
      %250 = vmatpush2.msra.mxu0 0.0
      %251 = vmatprep.mubr.f32.mxu0 0.0
      %252 = vmatmul.mubr.f32.gmra.mxu0 %v182
      %v253 = vpop.f32.mrf.mxu0
      %v254 = vadd.f32 %v173, %v253
      %v255 = vpop.f32.mrf.mxu0
      %v256 = vadd.f32 %v177, %v255
      %257 = vmatprep.mubr.f32.mxu0 0.0
      %258 = vmatmul.mubr.f32.gmra.mxu0 %v185
      %v259 = vpop.f32.mrf.mxu0
      %v260 = vadd.f32 %v173, %v259
      %v261 = vpop.f32.mrf.mxu0
      %v262 = vadd.f32 %v177, %v261
      %263 = vdwg.mxu0
      %v264 = vld [vmem:[%s1 + $0x10] sm:$0xff]
      %v265 = vld [vmem:[%s1 + $0x30] sm:$0xff]
      %v266 = vld [vmem:[%s1 + $0x50] sm:$0xff]
      %v267 = vld [vmem:[%s1 + $0x70] sm:$0xff]
      %v268 = vld [vmem:[%s1 + $0x90] sm:$0xff]
      %v269 = vld [vmem:[%s1 + $0xb0] sm:$0xff]
      %v270 = vld [vmem:[%s1 + $0xd0] sm:$0xff]
      %v271 = vld [vmem:[%s1 + $0xf0] sm:$0xff]
      %v272 = vld [vmem:[%s1 + $0x110] sm:$0xff]
      %v273 = vld [vmem:[%s1 + $0x130] sm:$0xff]
      %v274 = vld [vmem:[%s1 + $0x150] sm:$0xff]
      %v275 = vld [vmem:[%s1 + $0x170] sm:$0xff]
      %v276 = vld [vmem:[%s1 + $0x190] sm:$0xff]
      %v277 = vld [vmem:[%s1 + $0x1b0] sm:$0xff]
      %v278 = vld [vmem:[%s1 + $0x1d0] sm:$0xff]
      %v279 = vld [vmem:[%s1 + $0x1f0] sm:$0xff]
      %v280 = vld [vmem:[%s1 + $0x210] ss:$0 sm:$0xff]
      %281 = vmatprep.subr.mxu0 0.0
      %282 = vmatpush1.msra.mxu0 %v279
      %283 = vmatprep.subr.mxu0 0.0
      %284 = vmatpush1.msra.mxu0 %v278
      %285 = vmatprep.subr.mxu0 0.0
      %286 = vmatpush1.msra.mxu0 %v277
      %287 = vmatprep.subr.mxu0 0.0
      %288 = vmatpush1.msra.mxu0 %v276
      %289 = vmatprep.subr.mxu0 0.0
      %290 = vmatpush1.msra.mxu0 %v275
      %291 = vmatprep.subr.mxu0 0.0
      %292 = vmatpush1.msra.mxu0 %v274
      %293 = vmatprep.subr.mxu0 0.0
      %294 = vmatpush1.msra.mxu0 %v273
      %295 = vmatprep.subr.mxu0 0.0
      %296 = vmatpush1.msra.mxu0 %v272
      %297 = vmatprep.subr.mxu0 0.0
      %298 = vmatpush1.msra.mxu0 %v271
      %299 = vmatprep.subr.mxu0 0.0
      %300 = vmatpush1.msra.mxu0 %v270
      %301 = vmatprep.subr.mxu0 0.0
      %302 = vmatpush1.msra.mxu0 %v269
      %303 = vmatprep.subr.mxu0 0.0
      %304 = vmatpush1.msra.mxu0 %v268
      %305 = vmatprep.subr.mxu0 0.0
      %306 = vmatpush1.msra.mxu0 %v267
      %307 = vmatprep.subr.mxu0 0.0
      %308 = vmatpush1.msra.mxu0 %v266
      %309 = vmatprep.subr.mxu0 0.0
      %310 = vmatpush1.msra.mxu0 %v265
      %311 = vmatprep.subr.mxu0 0.0
      %312 = vmatpush1.msra.mxu0 %v264
      %313 = vmatprep.subr.mxu0 0.0
      %314 = vmatpush2.msra.mxu0 0.0
      %315 = vmatprep.subr.mxu0 0.0
      %316 = vmatpush2.msra.mxu0 0.0
      %317 = vmatprep.subr.mxu0 0.0
      %318 = vmatpush2.msra.mxu0 0.0
      %319 = vmatprep.subr.mxu0 0.0
      %320 = vmatpush2.msra.mxu0 0.0
      %321 = vmatprep.subr.mxu0 0.0
      %322 = vmatpush2.msra.mxu0 0.0
      %323 = vmatprep.subr.mxu0 0.0
      %324 = vmatpush2.msra.mxu0 0.0
      %325 = vmatprep.subr.mxu0 0.0
      %326 = vmatpush2.msra.mxu0 0.0
      %327 = vmatprep.subr.mxu0 0.0
      %328 = vmatpush2.msra.mxu0 0.0
      %329 = vmatprep.subr.mxu0 0.0
      %330 = vmatpush2.msra.mxu0 0.0
      %331 = vmatprep.subr.mxu0 0.0
      %332 = vmatpush2.msra.mxu0 0.0
      %333 = vmatprep.subr.mxu0 0.0
      %334 = vmatpush2.msra.mxu0 0.0
      %335 = vmatprep.subr.mxu0 0.0
      %336 = vmatpush2.msra.mxu0 0.0
      %337 = vmatprep.subr.mxu0 0.0
      %338 = vmatpush2.msra.mxu0 0.0
      %339 = vmatprep.subr.mxu0 0.0
      %340 = vmatpush2.msra.mxu0 0.0
      %341 = vmatprep.subr.mxu0 0.0
      %342 = vmatpush2.msra.mxu0 0.0
      %343 = vmatprep.subr.mxu0 0.0
      %344 = vmatpush2.msra.mxu0 0.0
      %345 = vmatprep.mubr.f32.mxu0 0.0
      %346 = vmatmul.mubr.f32.gmra.mxu0 %v256
      %v347 = vpop.f32.mrf.mxu0
      %v348 = vadd.f32 %v280, %v347
      %v349 = vpop.f32.mrf.mxu0
      %350 = vmatprep.mubr.f32.mxu0 0.0
      %351 = vmatmul.mubr.f32.gmra.mxu0 %v262
      %v352 = vpop.f32.mrf.mxu0
      %v353 = vadd.f32 %v280, %v352
      %v354 = vpop.f32.mrf.mxu0
      %355 = vdwg.mxu0
      %v356 = vld [vmem:[%s1 + $0x18] sm:$0xff]
      %v357 = vld [vmem:[%s1 + $0x38] sm:$0xff]
      %v358 = vld [vmem:[%s1 + $0x58] sm:$0xff]
      %v359 = vld [vmem:[%s1 + $0x78] sm:$0xff]
      %v360 = vld [vmem:[%s1 + $0x98] sm:$0xff]
      %v361 = vld [vmem:[%s1 + $0xb8] sm:$0xff]
      %v362 = vld [vmem:[%s1 + $0xd8] sm:$0xff]
      %v363 = vld [vmem:[%s1 + $0xf8] sm:$0xff]
      %v364 = vld [vmem:[%s1 + $0x218] ss:$0 sm:$0xff]
      %367 = vrot.lane.b32.xlu0 %v348, 64
      %v368 = vpop.permute.xlu0 %367
      %369 = vrot.lane.b32.xlu0 %v353, 64
      %v370 = vpop.permute.xlu0 %369
      %v371 = vsel %vm180, %v368, 0
      %v373 = vsel %vm180, %v370, 0
      %375 = vmatprep.subr.mxu0 0.0
      %376 = vmatpush1.msra.mxu0 0.0
      %377 = vmatprep.subr.mxu0 0.0
      %378 = vmatpush1.msra.mxu0 0.0
      %379 = vmatprep.subr.mxu0 0.0
      %380 = vmatpush1.msra.mxu0 0.0
      %381 = vmatprep.subr.mxu0 0.0
      %382 = vmatpush1.msra.mxu0 0.0
      %383 = vmatprep.subr.mxu0 0.0
      %384 = vmatpush1.msra.mxu0 0.0
      %385 = vmatprep.subr.mxu0 0.0
      %386 = vmatpush1.msra.mxu0 0.0
      %387 = vmatprep.subr.mxu0 0.0
      %388 = vmatpush1.msra.mxu0 0.0
      %389 = vmatprep.subr.mxu0 0.0
      %390 = vmatpush1.msra.mxu0 0.0
      %391 = vmatprep.subr.mxu0 0.0
      %392 = vmatpush1.msra.mxu0 %v363
      %393 = vmatprep.subr.mxu0 0.0
      %394 = vmatpush1.msra.mxu0 %v362
      %395 = vmatprep.subr.mxu0 0.0
      %396 = vmatpush1.msra.mxu0 %v361
      %397 = vmatprep.subr.mxu0 0.0
      %398 = vmatpush1.msra.mxu0 %v360
      %399 = vmatprep.subr.mxu0 0.0
      %400 = vmatpush1.msra.mxu0 %v359
      %401 = vmatprep.subr.mxu0 0.0
      %402 = vmatpush1.msra.mxu0 %v358
      %403 = vmatprep.subr.mxu0 0.0
      %404 = vmatpush1.msra.mxu0 %v357
      %405 = vmatprep.subr.mxu0 0.0
      %406 = vmatpush1.msra.mxu0 %v356
      %407 = vmatprep.subr.mxu0 0.0
      %408 = vmatpush2.msra.mxu0 0.0
      %409 = vmatprep.subr.mxu0 0.0
      %410 = vmatpush2.msra.mxu0 0.0
      %411 = vmatprep.subr.mxu0 0.0
      %412 = vmatpush2.msra.mxu0 0.0
      %413 = vmatprep.subr.mxu0 0.0
      %414 = vmatpush2.msra.mxu0 0.0
      %415 = vmatprep.subr.mxu0 0.0
      %416 = vmatpush2.msra.mxu0 0.0
      %417 = vmatprep.subr.mxu0 0.0
      %418 = vmatpush2.msra.mxu0 0.0
      %419 = vmatprep.subr.mxu0 0.0
      %420 = vmatpush2.msra.mxu0 0.0
      %421 = vmatprep.subr.mxu0 0.0
      %422 = vmatpush2.msra.mxu0 0.0
      %423 = vmatprep.subr.mxu0 0.0
      %424 = vmatpush2.msra.mxu0 0.0
      %425 = vmatprep.subr.mxu0 0.0
      %426 = vmatpush2.msra.mxu0 0.0
      %427 = vmatprep.subr.mxu0 0.0
      %428 = vmatpush2.msra.mxu0 0.0
      %429 = vmatprep.subr.mxu0 0.0
      %430 = vmatpush2.msra.mxu0 0.0
      %431 = vmatprep.subr.mxu0 0.0
      %432 = vmatpush2.msra.mxu0 0.0
      %433 = vmatprep.subr.mxu0 0.0
      %434 = vmatpush2.msra.mxu0 0.0
      %435 = vmatprep.subr.mxu0 0.0
      %436 = vmatpush2.msra.mxu0 0.0
      %437 = vmatprep.subr.mxu0 0.0
      %438 = vmatpush2.msra.mxu0 0.0
      %439 = vmatprep.mubr.f32.mxu0 0.0
      %440 = vmatmul.mubr.f32.gmra.mxu0 %v371
      %v441 = vpop.f32.mrf.mxu0
      %v442 = vadd.f32 %v364, %v441
      %v443 = vpop.f32.mrf.mxu0
      %444 = vmatprep.mubr.f32.mxu0 0.0
      %445 = vmatmul.mubr.f32.gmra.mxu0 %v373
      %v446 = vpop.f32.mrf.mxu0
      %v447 = vadd.f32 %v364, %v446
      %v448 = vpop.f32.mrf.mxu0
      %449 = vdwg.mxu0
      %452 = vrot.lane.b32.xlu0 %v442, 64
      %v453 = vpop.permute.xlu0 %452
      %454 = vrot.lane.b32.xlu0 %v447, 64
      %v455 = vpop.permute.xlu0 %454
      %v458 = vsel %vm180, %v348, %v453
      %v459 = vsel %vm180, %v353, %v455
      %460 = vst [vmem:[%s147] sm:$0xff] %v254
      %461 = vst [vmem:[%s147 + $0x8] sm:$0xff] %v458
      %462 = vst [vmem:[%s147 + $0x10] sm:$0xff] %v260
      %463 = vst [vmem:[%s147 + $0x18] sm:$0xff] %v459
      %s464 = smul.u32 2, %s13
      %p465 = scmp.lt.s32.totalorder %s464, 3
      %s466 = scalar_select %p465, %s464, 3
      %s467 = smul.addr %s466, 2
      %s468 = smul.addr %s467, 8
      %s469 = scalar_lea.vmem %s2, %s468
      // Predicated region
      $region29: #{inception_block_forward.1} parent=27 // pred_check
        %p470 = pneg %p78
      $region30: #{inception_block_forward.1} parent=27 // pred_check_branch
        %472 = sbr.rel (%p470) target = $region32
      $region31: #{inception_block_forward.1} parent=27 // pred_region
        %s473 = smul.u32 2, %s13
      $region32: #{inception_block_forward.1} parent=27 // pred_fallthru
        _
    $region28: #{inception_block_forward.1} parent=5 // pred_fallthru
      _
    %p474 = scmp.le.s32.totalorder 2, %s8
    // Predicated region
    $region33: #{inception_block_forward.1} parent=5 // pred_check
      %p475 = pneg %p474
    $region34: #{inception_block_forward.1} parent=5 // pred_check_branch
      %477 = sbr.rel (%p475) target = $region36
    $region35: #{inception_block_forward.1} parent=5 // pred_region
      %s478 = ssub.s32 %s8, 2
      // Predicated region
      $region37: #{inception_block_forward.1} parent=35 // pred_check
        %p479 = pneg %p84
      $region38: #{inception_block_forward.1} parent=35 // pred_check_branch
        %481 = sbr.rel (%p479) target = $region40
      $region39: #{inception_block_forward.1} parent=35 // pred_region
        %s482 = smul.u32 2, %s14
        %p483 = scmp.lt.s32.totalorder %s482, 3
        %s484 = scalar_select %p483, %s482, 3
        %s485 = smul.addr %s484, 2
        %s486 = smul.addr %s485, 8
        %s487 = scalar_lea.vmem %s2, %s486
      $region40: #{inception_block_forward.1} parent=35 // pred_fallthru
        _
    $region36: #{inception_block_forward.1} parent=5 // pred_fallthru
      _
  $region6: #{inception_block_forward.1} parent=0 // loop_footer
    %s12 = sadd.s32 1, %s8
  $region7: #{inception_block_forward.1} parent=0 // loop_footer_branch
    %7 = sbr.rel target = $region3
  $region8: #{inception_block_forward.1} parent=0 // loop_exit
    _

</llo_original>
